<compile_context>
chip_gen: v5e
topology: v5e:2x2
jax: 0.10.0
libtpu: 0.0.40
codegen_flags: <defaults>
</compile_context>

<pallas_src>
import functools

import jax
import jax.numpy as jnp
from jax import lax
from jax.experimental import pallas as pl
from jax.experimental.pallas import tpu as pltpu


def mlp_kernel(x_ref, c_ref, b2_ref, o_ref, *, chunk):
    # x_ref : (in_dim, TB)         activation tile, batch on the 128-wide lane axis
    # c_ref : (hidden, in_dim+2)   packed constants [0.5*w1 | 0.5*b1 | 0.5*w2], VMEM-resident
    # b2_ref: (1, 1) in SMEM       effective output bias  b2 + 0.5*sum(w2)
    # o_ref : (1, TB)              lane-dense output slab
    in_dim, tb = x_ref.shape
    hidden = c_ref.shape[0]
    n_chunks = hidden // chunk

    # Load the input rows once; they stay live across the chunk loop (in_dim vregs/stripe).
    x_rows = [x_ref[k:k + 1, :] for k in range(in_dim)]

    def chunk_body(i, acc):
        off = pl.multiple_of(i * chunk, chunk)
        blk = c_ref[pl.ds(off, chunk), :]                     # per-chunk constant load
        # Layer 1 on the VPU (a K=2 matmul would waste the MXU): two broadcast FMAs.
        h = blk[:, in_dim:in_dim + 1]                         # 0.5*b1 chunk (broadcasts)
        for k in range(in_dim):                               # static, in_dim == 2
            h = h + blk[:, k:k + 1] * x_rows[k]               # (chunk,1)*(1,TB) -> (chunk,TB)
        # sigmoid(z) = 0.5*tanh(0.5*z) + 0.5; the 0.5's are folded into the packed
        # constants / b2_eff, so this is ONE EUP push per vreg (vs exp + reciprocal).
        t = jnp.tanh(h)
        # Layer 2 (out_dim == 1): VPU multiply + XLU sublane reduce, accumulate (1, TB).
        return acc + jnp.sum(t * blk[:, in_dim + 1:in_dim + 2], axis=0, keepdims=True)

    # Chunked over `hidden` so only a (chunk, TB) slab is live per step instead of the
    # full (hidden, TB) intermediate -> bounded vreg pressure even at TB = 1024.
    acc = lax.fori_loop(0, n_chunks, chunk_body,
                        jnp.zeros((1, tb), jnp.float32), unroll=True)
    o_ref[...] = (acc + b2_ref[0, 0]).astype(o_ref.dtype)


def _round_up(x, m):
    return (x + m - 1) // m * m


def _pick_batch_tile(n, tb_max=1024):
    """Small N -> one round_up(N,128) tile (grid of 1).  Larger N -> tiles up to tb_max
    while keeping >=2 grid steps so the parallel batch axis covers both v7x TensorCores."""
    n128 = _round_up(max(n, 1), 128)
    if n128 <= 256:
        return n128
    return min(tb_max, _round_up(pl.cdiv(n128, 2), 128))


def net_forward(x, w1, b1, w2, b2, *, tb_max=1024):
    """Forward pass of Net.

    x : (N, in_dim) f32
    w1: (hidden, in_dim)   -- torch Linear1.weight layout
    b1: (hidden,)
    w2: (out_dim, hidden)  -- torch Linear2.weight layout (out_dim must be 1)
    b2: (out_dim,)
    Returns (N, out_dim).
    """
    n, in_dim = x.shape
    hidden = w1.shape[0]
    out_dim = w2.shape[0]
    assert out_dim == 1, "kernel specializes the out_dim=1 layer to a lane reduce"

    chunk = min(64, hidden)
    assert hidden % chunk == 0, "hidden must be a multiple of the 64-row chunk"

    tb = _pick_batch_tile(n, tb_max)
    num_tiles = pl.cdiv(n, tb)
    n_pad = num_tiles * tb

    # Layout plumbing (batch -> lanes).  Under jit XLA fuses the transpose+pad into a
    # single copy; for a fully zero-copy path feed data already laid out as (in_dim, N).
    x_t = jnp.pad(x.T, ((0, 0), (0, n_pad - n)))              # (in_dim, n_pad)

    # Pack all layer constants into one VMEM-resident block, folding the 0.5's of the
    # tanh-sigmoid identity into them.
    consts = jnp.concatenate(
        [0.5 * w1,                                            # (hidden, in_dim)
         0.5 * b1.reshape(hidden, 1),                         # (hidden, 1)
         0.5 * w2.reshape(hidden, 1)],                        # (hidden, 1)
        axis=1).astype(jnp.float32)
    b2_eff = (b2.reshape(1, 1) + 0.5 * jnp.sum(w2)).astype(jnp.float32)

    out_padded = pl.pallas_call(
        functools.partial(mlp_kernel, chunk=chunk),
        out_shape=jax.ShapeDtypeStruct((1, n_pad), x.dtype),
        grid=(num_tiles,),
        in_specs=[
            pl.BlockSpec((in_dim, tb), lambda i: (0, i)),          # pipelined x tile
            pl.BlockSpec((hidden, in_dim + 2), lambda i: (0, 0)),  # packed constants (VMEM)
            pl.BlockSpec(memory_space=pltpu.MemorySpace.SMEM),     # scalar bias in SMEM
        ],
        out_specs=pl.BlockSpec((1, tb), lambda i: (0, i)),         # lane-dense output
        compiler_params=pltpu.CompilerParams(
            dimension_semantics=("parallel",)),
    )(x_t, consts, b2_eff)

    return out_padded[0, :n].reshape(n, out_dim)


def init_params(key, input_node=2, hidden_node=256, output_node=1, dtype=jnp.float32):
    """nn.Linear default init, uniform(-1/sqrt(fan_in), 1/sqrt(fan_in)), torch layouts."""
    k1, k2, k3, k4 = jax.random.split(key, 4)
    bound1 = 1.0 / (input_node ** 0.5)
    bound2 = 1.0 / (hidden_node ** 0.5)
    w1 = jax.random.uniform(k1, (hidden_node, input_node), dtype, -bound1, bound1)
    b1 = jax.random.uniform(k2, (hidden_node,), dtype, -bound1, bound1)
    w2 = jax.random.uniform(k3, (output_node, hidden_node), dtype, -bound2, bound2)
    b2 = jax.random.uniform(k4, (output_node,), dtype, -bound2, bound2)
    return w1, b1, w2, b2


def _reference(x, w1, b1, w2, b2):
    return jax.nn.sigmoid(x @ w1.T + b1) @ w2.T + b2


if __name__ == "__main__":
    key = jax.random.PRNGKey(0)
    kx, kp = jax.random.split(key)

    input_node, hidden_node, output_node = 2, 256, 1
    w1, b1, w2, b2 = init_params(kp, input_node, hidden_node, output_node)

    fwd = jax.jit(net_forward)

    # batch=8 matches the original usage; 200 exercises padding inside one tile;
    # 2048 exercises the >=2-tile (dual-TensorCore) path with TB=1024.
    for batch in (8, 200, 2048):
        x = jax.random.normal(jax.random.fold_in(kx, batch),
                              (batch, input_node), dtype=jnp.float32)
        out = jax.block_until_ready(fwd(x, w1, b1, w2, b2))
        ref = _reference(x, w1, b1, w2, b2)
        assert out.shape == (batch, output_node)
        assert jnp.allclose(out, ref, atol=1e-4, rtol=1e-4), (
            f"mismatch at batch={batch}: max abs err {jnp.max(jnp.abs(out - ref))}")

    print("KERNEL_OK")
</pallas_src>

<mosaic_0001>
module attributes {stable_mosaic.version = 11 : i64} {
  func.func @mlp_kernel(%arg0: i32, %arg1: memref<2x128xf32, #tpu.memory_space<vmem>>, %arg2: memref<256x4xf32, #tpu.memory_space<vmem>>, %arg3: memref<1x1xf32, #tpu.memory_space<smem>>, %arg4: memref<1x128xf32, #tpu.memory_space<vmem>>) attributes {dimension_semantics = [#tpu.dimension_semantics<parallel>], iteration_bounds = array<i64: 1>, scalar_prefetch = 0 : i64, scratch_operands = 0 : i64, tpu.core_type = #tpu.core_type<tc>, window_params = [{transform_indices = @transform_0, window_bounds = array<i64: 2, 128>}, {pipeline_mode = #tpu.pipeline_mode<synchronous>, transform_indices = @transform_1, window_bounds = array<i64: 256, 4>}, {transform_indices = @transform_2, window_bounds = array<i64: 1, 1>}, {transform_indices = @transform_3, window_bounds = array<i64: 1, 128>}]} {
    %c0 = arith.constant 0 : index
    %c0_0 = arith.constant 0 : index
    %0 = vector.load %arg1[%c0, %c0_0] : memref<2x128xf32, #tpu.memory_space<vmem>>, vector<1x128xf32>
    %c1 = arith.constant 1 : index
    %c0_1 = arith.constant 0 : index
    %1 = vector.load %arg1[%c1, %c0_1] : memref<2x128xf32, #tpu.memory_space<vmem>>, vector<1x128xf32>
    %cst = arith.constant 0.000000e+00 : f32
    %2 = vector.broadcast %cst : f32 to vector<1x128xf32>
    %c0_i32 = arith.constant 0 : i32
    %c64_i32 = arith.constant 64 : i32
    %3 = arith.muli %c0_i32, %c64_i32 : i32
    %4 = tpu.assume_multiple %3, 64 : i32
    %5 = arith.index_cast %4 : i32 to index
    %c0_2 = arith.constant 0 : index
    %6 = vector.load %arg2[%5, %c0_2] : memref<256x4xf32, #tpu.memory_space<vmem>>, vector<64x4xf32>
    %7 = vector.extract_strided_slice %6 {offsets = [0, 2], sizes = [64, 1], strides = [1, 1]} : vector<64x4xf32> to vector<64x1xf32>
    %8 = vector.extract_strided_slice %6 {offsets = [0, 0], sizes = [64, 1], strides = [1, 1]} : vector<64x4xf32> to vector<64x1xf32>
    %9 = vector.broadcast %8 : vector<64x1xf32> to vector<64x128xf32>
    %10 = vector.broadcast %0 : vector<1x128xf32> to vector<64x128xf32>
    %11 = arith.mulf %9, %10 : vector<64x128xf32>
    %12 = vector.broadcast %7 : vector<64x1xf32> to vector<64x128xf32>
    %13 = arith.addf %12, %11 : vector<64x128xf32>
    %14 = vector.extract_strided_slice %6 {offsets = [0, 1], sizes = [64, 1], strides = [1, 1]} : vector<64x4xf32> to vector<64x1xf32>
    %15 = vector.broadcast %14 : vector<64x1xf32> to vector<64x128xf32>
    %16 = vector.broadcast %1 : vector<1x128xf32> to vector<64x128xf32>
    %17 = arith.mulf %15, %16 : vector<64x128xf32>
    %18 = arith.addf %13, %17 : vector<64x128xf32>
    %19 = math.tanh %18 : vector<64x128xf32>
    %20 = vector.extract_strided_slice %6 {offsets = [0, 3], sizes = [64, 1], strides = [1, 1]} : vector<64x4xf32> to vector<64x1xf32>
    %21 = vector.broadcast %20 : vector<64x1xf32> to vector<64x128xf32>
    %22 = arith.mulf %19, %21 : vector<64x128xf32>
    %cst_3 = arith.constant dense<0.000000e+00> : vector<128xf32>
    %23 = vector.multi_reduction <add>, %22, %cst_3 [0] : vector<64x128xf32> to vector<128xf32>
    %24 = vector.shape_cast %23 : vector<128xf32> to vector<1x128xf32>
    %25 = arith.addf %2, %24 : vector<1x128xf32>
    %c1_i32 = arith.constant 1 : i32
    %c64_i32_4 = arith.constant 64 : i32
    %26 = arith.muli %c1_i32, %c64_i32_4 : i32
    %27 = tpu.assume_multiple %26, 64 : i32
    %28 = arith.index_cast %27 : i32 to index
    %c0_5 = arith.constant 0 : index
    %29 = vector.load %arg2[%28, %c0_5] : memref<256x4xf32, #tpu.memory_space<vmem>>, vector<64x4xf32>
    %30 = vector.extract_strided_slice %29 {offsets = [0, 2], sizes = [64, 1], strides = [1, 1]} : vector<64x4xf32> to vector<64x1xf32>
    %31 = vector.extract_strided_slice %29 {offsets = [0, 0], sizes = [64, 1], strides = [1, 1]} : vector<64x4xf32> to vector<64x1xf32>
    %32 = vector.broadcast %31 : vector<64x1xf32> to vector<64x128xf32>
    %33 = vector.broadcast %0 : vector<1x128xf32> to vector<64x128xf32>
    %34 = arith.mulf %32, %33 : vector<64x128xf32>
    %35 = vector.broadcast %30 : vector<64x1xf32> to vector<64x128xf32>
    %36 = arith.addf %35, %34 : vector<64x128xf32>
    %37 = vector.extract_strided_slice %29 {offsets = [0, 1], sizes = [64, 1], strides = [1, 1]} : vector<64x4xf32> to vector<64x1xf32>
    %38 = vector.broadcast %37 : vector<64x1xf32> to vector<64x128xf32>
    %39 = vector.broadcast %1 : vector<1x128xf32> to vector<64x128xf32>
    %40 = arith.mulf %38, %39 : vector<64x128xf32>
    %41 = arith.addf %36, %40 : vector<64x128xf32>
    %42 = math.tanh %41 : vector<64x128xf32>
    %43 = vector.extract_strided_slice %29 {offsets = [0, 3], sizes = [64, 1], strides = [1, 1]} : vector<64x4xf32> to vector<64x1xf32>
    %44 = vector.broadcast %43 : vector<64x1xf32> to vector<64x128xf32>
    %45 = arith.mulf %42, %44 : vector<64x128xf32>
    %cst_6 = arith.constant dense<0.000000e+00> : vector<128xf32>
    %46 = vector.multi_reduction <add>, %45, %cst_6 [0] : vector<64x128xf32> to vector<128xf32>
    %47 = vector.shape_cast %46 : vector<128xf32> to vector<1x128xf32>
    %48 = arith.addf %25, %47 : vector<1x128xf32>
    %c2_i32 = arith.constant 2 : i32
    %c64_i32_7 = arith.constant 64 : i32
    %49 = arith.muli %c2_i32, %c64_i32_7 : i32
    %50 = tpu.assume_multiple %49, 64 : i32
    %51 = arith.index_cast %50 : i32 to index
    %c0_8 = arith.constant 0 : index
    %52 = vector.load %arg2[%51, %c0_8] : memref<256x4xf32, #tpu.memory_space<vmem>>, vector<64x4xf32>
    %53 = vector.extract_strided_slice %52 {offsets = [0, 2], sizes = [64, 1], strides = [1, 1]} : vector<64x4xf32> to vector<64x1xf32>
    %54 = vector.extract_strided_slice %52 {offsets = [0, 0], sizes = [64, 1], strides = [1, 1]} : vector<64x4xf32> to vector<64x1xf32>
    %55 = vector.broadcast %54 : vector<64x1xf32> to vector<64x128xf32>
    %56 = vector.broadcast %0 : vector<1x128xf32> to vector<64x128xf32>
    %57 = arith.mulf %55, %56 : vector<64x128xf32>
    %58 = vector.broadcast %53 : vector<64x1xf32> to vector<64x128xf32>
    %59 = arith.addf %58, %57 : vector<64x128xf32>
    %60 = vector.extract_strided_slice %52 {offsets = [0, 1], sizes = [64, 1], strides = [1, 1]} : vector<64x4xf32> to vector<64x1xf32>
    %61 = vector.broadcast %60 : vector<64x1xf32> to vector<64x128xf32>
    %62 = vector.broadcast %1 : vector<1x128xf32> to vector<64x128xf32>
    %63 = arith.mulf %61, %62 : vector<64x128xf32>
    %64 = arith.addf %59, %63 : vector<64x128xf32>
    %65 = math.tanh %64 : vector<64x128xf32>
    %66 = vector.extract_strided_slice %52 {offsets = [0, 3], sizes = [64, 1], strides = [1, 1]} : vector<64x4xf32> to vector<64x1xf32>
    %67 = vector.broadcast %66 : vector<64x1xf32> to vector<64x128xf32>
    %68 = arith.mulf %65, %67 : vector<64x128xf32>
    %cst_9 = arith.constant dense<0.000000e+00> : vector<128xf32>
    %69 = vector.multi_reduction <add>, %68, %cst_9 [0] : vector<64x128xf32> to vector<128xf32>
    %70 = vector.shape_cast %69 : vector<128xf32> to vector<1x128xf32>
    %71 = arith.addf %48, %70 : vector<1x128xf32>
    %c3_i32 = arith.constant 3 : i32
    %c64_i32_10 = arith.constant 64 : i32
    %72 = arith.muli %c3_i32, %c64_i32_10 : i32
    %73 = tpu.assume_multiple %72, 64 : i32
    %74 = arith.index_cast %73 : i32 to index
    %c0_11 = arith.constant 0 : index
    %75 = vector.load %arg2[%74, %c0_11] : memref<256x4xf32, #tpu.memory_space<vmem>>, vector<64x4xf32>
    %76 = vector.extract_strided_slice %75 {offsets = [0, 2], sizes = [64, 1], strides = [1, 1]} : vector<64x4xf32> to vector<64x1xf32>
    %77 = vector.extract_strided_slice %75 {offsets = [0, 0], sizes = [64, 1], strides = [1, 1]} : vector<64x4xf32> to vector<64x1xf32>
    %78 = vector.broadcast %77 : vector<64x1xf32> to vector<64x128xf32>
    %79 = vector.broadcast %0 : vector<1x128xf32> to vector<64x128xf32>
    %80 = arith.mulf %78, %79 : vector<64x128xf32>
    %81 = vector.broadcast %76 : vector<64x1xf32> to vector<64x128xf32>
    %82 = arith.addf %81, %80 : vector<64x128xf32>
    %83 = vector.extract_strided_slice %75 {offsets = [0, 1], sizes = [64, 1], strides = [1, 1]} : vector<64x4xf32> to vector<64x1xf32>
    %84 = vector.broadcast %83 : vector<64x1xf32> to vector<64x128xf32>
    %85 = vector.broadcast %1 : vector<1x128xf32> to vector<64x128xf32>
    %86 = arith.mulf %84, %85 : vector<64x128xf32>
    %87 = arith.addf %82, %86 : vector<64x128xf32>
    %88 = math.tanh %87 : vector<64x128xf32>
    %89 = vector.extract_strided_slice %75 {offsets = [0, 3], sizes = [64, 1], strides = [1, 1]} : vector<64x4xf32> to vector<64x1xf32>
    %90 = vector.broadcast %89 : vector<64x1xf32> to vector<64x128xf32>
    %91 = arith.mulf %88, %90 : vector<64x128xf32>
    %cst_12 = arith.constant dense<0.000000e+00> : vector<128xf32>
    %92 = vector.multi_reduction <add>, %91, %cst_12 [0] : vector<64x128xf32> to vector<128xf32>
    %93 = vector.shape_cast %92 : vector<128xf32> to vector<1x128xf32>
    %94 = arith.addf %71, %93 : vector<1x128xf32>
    %c4_i32 = arith.constant 4 : i32
    %c0_13 = arith.constant 0 : index
    %c0_14 = arith.constant 0 : index
    %95 = memref.load %arg3[%c0_13, %c0_14] : memref<1x1xf32, #tpu.memory_space<smem>>
    %96 = vector.broadcast %95 : f32 to vector<1x128xf32>
    %97 = arith.addf %94, %96 : vector<1x128xf32>
    %c0_15 = arith.constant 0 : index
    %c0_16 = arith.constant 0 : index
    %98 = vector.load %arg4[%c0_15, %c0_16] : memref<1x128xf32, #tpu.memory_space<vmem>>, vector<1x128xf32>
    tpu.vector_store %arg4[%c0_15, %c0_16], %97 {strides = array<i32>} : memref<1x128xf32, #tpu.memory_space<vmem>>, vector<1x128xf32>,
    return
  }
  func.func @transform_0(%arg0: i32) -> (i32, i32) {
    %c0_i32 = arith.constant 0 : i32
    %c0_i32_0 = arith.constant 0 : i32
    return %c0_i32, %arg0 : i32, i32
  }
  func.func @transform_1(%arg0: i32) -> (i32, i32) {
    %c0_i32 = arith.constant 0 : i32
    %c0_i32_0 = arith.constant 0 : i32
    %c0_i32_1 = arith.constant 0 : i32
    return %c0_i32, %c0_i32_0 : i32, i32
  }
  func.func @transform_2(%arg0: i32) -> (i32, i32) {
    %c0_i32 = arith.constant 0 : i32
    %c0_i32_0 = arith.constant 0 : i32
    %c0_i32_1 = arith.constant 0 : i32
    return %c0_i32, %c0_i32_0 : i32, i32
  }
  func.func @transform_3(%arg0: i32) -> (i32, i32) {
    %c0_i32 = arith.constant 0 : i32
    %c0_i32_0 = arith.constant 0 : i32
    return %c0_i32, %arg0 : i32, i32
  }
}

</mosaic_0001>

<llo_original>
// kernel: net_forward.1
$region0: #{net_forward.1}
  #allocation0 [shape = 'u32[]', space=smem, size = 0x4, offset = 0x4, fixed_abs, tag = 'smem constant byte address 0x4 - core index']
  #allocation1 [shape = 'u32[72,128]{1,0:T(1,128)}', space=vmem, size = 0x9000, scoped, tag = 'internal scratch']
  #allocation2 [shape = 'f32[1,1]{1,0:T(1,128)S(6)}', space=smem, size = 0x200, scoped, tag = 'scoped memory for net_forward.1']
  %s0 = inlined_call_operand.vmem [shape: f32[2,128], index: 0, kind: input, shape index: {}]
  %s1 = inlined_call_operand.vmem [shape: f32[256,4], index: 1, kind: input, shape index: {}]
  %s2 = inlined_call_operand.<no memory space> [shape: f32[1,1], index: 2, kind: input, shape index: {}]
  %s3 = inlined_call_operand.vmem [shape: f32[1,128], index: 3, kind: output, shape index: {}]
  %s4 = sld [smem:[#allocation0]]
  $region22: #{net_forward.1} parent=0
    _
  %s6 = ssub.s32 1, %s4
  %s7 = scalar_select 0, %s6, %s4
  %8 = sst [smem:[#allocation2]] %s2
  // Predicated region
  $region2: #{net_forward.1} parent=0 // pred_check
    _
  $region3: #{net_forward.1} parent=0 // pred_check_branch
    %10 = sbr.rel (0) target = $region5
  $region4: #{net_forward.1} parent=0 // pred_region
    _
  $region5: #{net_forward.1} parent=0 // pred_fallthru
    _
  // Predicated region
  $region6: #{net_forward.1} parent=0 // pred_check
    _
  $region7: #{net_forward.1} parent=0 // pred_check_branch
    %12 = sbr.rel (0) target = $region9
  $region8: #{net_forward.1} parent=0 // pred_region
    _
  $region9: #{net_forward.1} parent=0 // pred_fallthru
    _
  // Predicated region
  $region10: #{net_forward.1} parent=0 // pred_check
    _
  $region11: #{net_forward.1} parent=0 // pred_check_branch
    %14 = sbr.rel (0) target = $region13
  $region12: #{net_forward.1} parent=0 // pred_region
    _
  $region13: #{net_forward.1} parent=0 // pred_fallthru
    _
  %v15 = vld [vmem:[%s0] sm:$0x1]
  %v16 = vld [vmem:[%s0 + $0x1] sm:$0x1]
  %v17 = vld [vmem:[%s1] sm:$0xff]
  %v18 = vld [vmem:[%s1 + $0x8] sm:$0xff]
  %v19 = vld [vmem:[%s1 + $0x10] sm:$0xff]
  %v20 = vld [vmem:[%s1 + $0x18] sm:$0xff]
  %v21 = vld [vmem:[%s1 + $0x20] sm:$0xff]
  %v22 = vld [vmem:[%s1 + $0x28] sm:$0xff]
  %v23 = vld [vmem:[%s1 + $0x30] sm:$0xff]
  %v24 = vld [vmem:[%s1 + $0x38] sm:$0xff]
  %26 = vset.pattern.permute.xlu0 0
  %27 = vperm.xlu0 %26, %v17
  %v28 = vpop.permute.xlu0 %27
  %31 = vset.pattern.permute.xlu0 0
  %32 = vperm.xlu0 %31, %v18
  %v33 = vpop.permute.xlu0 %32
  %36 = vset.pattern.permute.xlu0 0
  %37 = vperm.xlu0 %36, %v19
  %v38 = vpop.permute.xlu0 %37
  %41 = vset.pattern.permute.xlu0 0
  %42 = vperm.xlu0 %41, %v20
  %v43 = vpop.permute.xlu0 %42
  %46 = vset.pattern.permute.xlu0 0
  %47 = vperm.xlu0 %46, %v21
  %v48 = vpop.permute.xlu0 %47
  %51 = vset.pattern.permute.xlu0 0
  %52 = vperm.xlu0 %51, %v22
  %v53 = vpop.permute.xlu0 %52
  %56 = vset.pattern.permute.xlu0 0
  %57 = vperm.xlu0 %56, %v23
  %v58 = vpop.permute.xlu0 %57
  %61 = vset.pattern.permute.xlu0 0
  %62 = vperm.xlu0 %61, %v24
  %v63 = vpop.permute.xlu0 %62
  %v65 = vperm.slane %v15, 0
  %v66 = vmul.f32 %v28, %v65
  %v67 = vmul.f32 %v33, %v65
  %v68 = vmul.f32 %v38, %v65
  %v69 = vmul.f32 %v43, %v65
  %v70 = vmul.f32 %v48, %v65
  %v71 = vmul.f32 %v53, %v65
  %v72 = vmul.f32 %v58, %v65
  %v73 = vmul.f32 %v63, %v65
  %74 = vset.pattern.permute.xlu0 2
  %75 = vperm.xlu0 %74, %v17
  %v76 = vpop.permute.xlu0 %75
  %78 = vset.pattern.permute.xlu0 2
  %79 = vperm.xlu0 %78, %v18
  %v80 = vpop.permute.xlu0 %79
  %82 = vset.pattern.permute.xlu0 2
  %83 = vperm.xlu0 %82, %v19
  %v84 = vpop.permute.xlu0 %83
  %86 = vset.pattern.permute.xlu0 2
  %87 = vperm.xlu0 %86, %v20
  %v88 = vpop.permute.xlu0 %87
  %90 = vset.pattern.permute.xlu0 2
  %91 = vperm.xlu0 %90, %v21
  %v92 = vpop.permute.xlu0 %91
  %94 = vset.pattern.permute.xlu0 2
  %95 = vperm.xlu0 %94, %v22
  %v96 = vpop.permute.xlu0 %95
  %98 = vset.pattern.permute.xlu0 2
  %99 = vperm.xlu0 %98, %v23
  %v100 = vpop.permute.xlu0 %99
  %102 = vset.pattern.permute.xlu0 2
  %103 = vperm.xlu0 %102, %v24
  %v104 = vpop.permute.xlu0 %103
  %v106 = vadd.f32 %v76, %v66
  %v107 = vadd.f32 %v80, %v67
  %v108 = vadd.f32 %v84, %v68
  %v109 = vadd.f32 %v88, %v69
  %v110 = vadd.f32 %v92, %v70
  %v111 = vadd.f32 %v96, %v71
  %v112 = vadd.f32 %v100, %v72
  %v113 = vadd.f32 %v104, %v73
  %114 = vset.pattern.permute.xlu0 1
  %115 = vperm.xlu0 %114, %v17
  %v116 = vpop.permute.xlu0 %115
  %118 = vset.pattern.permute.xlu0 1
  %119 = vperm.xlu0 %118, %v18
  %v120 = vpop.permute.xlu0 %119
  %122 = vset.pattern.permute.xlu0 1
  %123 = vperm.xlu0 %122, %v19
  %v124 = vpop.permute.xlu0 %123
  %126 = vset.pattern.permute.xlu0 1
  %127 = vperm.xlu0 %126, %v20
  %v128 = vpop.permute.xlu0 %127
  %130 = vset.pattern.permute.xlu0 1
  %131 = vperm.xlu0 %130, %v21
  %v132 = vpop.permute.xlu0 %131
  %134 = vset.pattern.permute.xlu0 1
  %135 = vperm.xlu0 %134, %v22
  %v136 = vpop.permute.xlu0 %135
  %138 = vset.pattern.permute.xlu0 1
  %139 = vperm.xlu0 %138, %v23
  %v140 = vpop.permute.xlu0 %139
  %142 = vset.pattern.permute.xlu0 1
  %143 = vperm.xlu0 %142, %v24
  %v144 = vpop.permute.xlu0 %143
  %v146 = vperm.slane %v16, 0
  %v147 = vmul.f32 %v116, %v146
  %v148 = vmul.f32 %v120, %v146
  %v149 = vmul.f32 %v124, %v146
  %v150 = vmul.f32 %v128, %v146
  %v151 = vmul.f32 %v132, %v146
  %v152 = vmul.f32 %v136, %v146
  %v153 = vmul.f32 %v140, %v146
  %v154 = vmul.f32 %v144, %v146
  %v155 = vadd.f32 %v106, %v147
  %v156 = vadd.f32 %v107, %v148
  %v157 = vadd.f32 %v108, %v149
  %v158 = vadd.f32 %v109, %v150
  %v159 = vadd.f32 %v110, %v151
  %v160 = vadd.f32 %v111, %v152
  %v161 = vadd.f32 %v112, %v153
  %v162 = vadd.f32 %v113, %v154
  %v163 = vtanh.pop %v155
  %v164 = vtanh.pop %v156
  %v165 = vtanh.pop %v157
  %v166 = vtanh.pop %v158
  %v167 = vtanh.pop %v159
  %v168 = vtanh.pop %v160
  %v169 = vtanh.pop %v161
  %v170 = vtanh.pop %v162
  %171 = vset.pattern.permute.xlu0 3
  %172 = vperm.xlu0 %171, %v17
  %v173 = vpop.permute.xlu0 %172
  %175 = vset.pattern.permute.xlu0 3
  %176 = vperm.xlu0 %175, %v18
  %v177 = vpop.permute.xlu0 %176
  %179 = vset.pattern.permute.xlu0 3
  %180 = vperm.xlu0 %179, %v19
  %v181 = vpop.permute.xlu0 %180
  %183 = vset.pattern.permute.xlu0 3
  %184 = vperm.xlu0 %183, %v20
  %v185 = vpop.permute.xlu0 %184
  %187 = vset.pattern.permute.xlu0 3
  %188 = vperm.xlu0 %187, %v21
  %v189 = vpop.permute.xlu0 %188
  %191 = vset.pattern.permute.xlu0 3
  %192 = vperm.xlu0 %191, %v22
  %v193 = vpop.permute.xlu0 %192
  %195 = vset.pattern.permute.xlu0 3
  %196 = vperm.xlu0 %195, %v23
  %v197 = vpop.permute.xlu0 %196
  %199 = vset.pattern.permute.xlu0 3
  %200 = vperm.xlu0 %199, %v24
  %v201 = vpop.permute.xlu0 %200
  %v203 = vmul.f32 %v163, %v173
  %v204 = vmul.f32 %v164, %v177
  %v205 = vmul.f32 %v165, %v181
  %v206 = vmul.f32 %v166, %v185
  %v207 = vmul.f32 %v167, %v189
  %v208 = vmul.f32 %v168, %v193
  %v209 = vmul.f32 %v169, %v197
  %v210 = vmul.f32 %v170, %v201
  %v211 = vadd.f32 %v203, %v204
  %v212 = vadd.f32 %v211, %v205
  %v213 = vadd.f32 %v212, %v206
  %v214 = vadd.f32 %v213, %v207
  %v215 = vadd.f32 %v214, %v208
  %v216 = vadd.f32 %v215, %v209
  %v217 = vadd.f32 %v216, %v210
  %v218 = vrot.slane %v217, 4
  %v219 = vadd.f32 %v217, %v218
  %v220 = vrot.slane %v219, 2
  %v221 = vadd.f32 %v219, %v220
  %v222 = vrot.slane %v221, 1
  %v223 = vadd.f32 %v221, %v222
  %v224 = vadd.f32 %v223, 0.0
  %s225 = scalar_lea.vmem %s1, 64
  %v226 = vld [vmem:[%s225] sm:$0xff]
  %v227 = vld [vmem:[%s225 + $0x8] sm:$0xff]
  %v228 = vld [vmem:[%s225 + $0x10] sm:$0xff]
  %v229 = vld [vmem:[%s225 + $0x18] sm:$0xff]
  %v230 = vld [vmem:[%s225 + $0x20] sm:$0xff]
  %v231 = vld [vmem:[%s225 + $0x28] sm:$0xff]
  %v232 = vld [vmem:[%s225 + $0x30] sm:$0xff]
  %v233 = vld [vmem:[%s225 + $0x38] sm:$0xff]
  %235 = vset.pattern.permute.xlu0 0
  %236 = vperm.xlu0 %235, %v226
  %v237 = vpop.permute.xlu0 %236
  %240 = vset.pattern.permute.xlu0 0
  %241 = vperm.xlu0 %240, %v227
  %v242 = vpop.permute.xlu0 %241
  %245 = vset.pattern.permute.xlu0 0
  %246 = vperm.xlu0 %245, %v228
  %v247 = vpop.permute.xlu0 %246
  %250 = vset.pattern.permute.xlu0 0
  %251 = vperm.xlu0 %250, %v229
  %v252 = vpop.permute.xlu0 %251
  %255 = vset.pattern.permute.xlu0 0
  %256 = vperm.xlu0 %255, %v230
  %v257 = vpop.permute.xlu0 %256
  %260 = vset.pattern.permute.xlu0 0
  %261 = vperm.xlu0 %260, %v231
  %v262 = vpop.permute.xlu0 %261
  %265 = vset.pattern.permute.xlu0 0
  %266 = vperm.xlu0 %265, %v232
  %v267 = vpop.permute.xlu0 %266
  %270 = vset.pattern.permute.xlu0 0
  %271 = vperm.xlu0 %270, %v233
  %v272 = vpop.permute.xlu0 %271
  %v274 = vmul.f32 %v237, %v65
  %v275 = vmul.f32 %v242, %v65
  %v276 = vmul.f32 %v247, %v65
  %v277 = vmul.f32 %v252, %v65
  %v278 = vmul.f32 %v257, %v65
  %v279 = vmul.f32 %v262, %v65
  %v280 = vmul.f32 %v267, %v65
  %v281 = vmul.f32 %v272, %v65
  %282 = vset.pattern.permute.xlu0 2
  %283 = vperm.xlu0 %282, %v226
  %v284 = vpop.permute.xlu0 %283
  %286 = vset.pattern.permute.xlu0 2
  %287 = vperm.xlu0 %286, %v227
  %v288 = vpop.permute.xlu0 %287
  %290 = vset.pattern.permute.xlu0 2
  %291 = vperm.xlu0 %290, %v228
  %v292 = vpop.permute.xlu0 %291
  %294 = vset.pattern.permute.xlu0 2
  %295 = vperm.xlu0 %294, %v229
  %v296 = vpop.permute.xlu0 %295
  %298 = vset.pattern.permute.xlu0 2
  %299 = vperm.xlu0 %298, %v230
  %v300 = vpop.permute.xlu0 %299
  %302 = vset.pattern.permute.xlu0 2
  %303 = vperm.xlu0 %302, %v231
  %v304 = vpop.permute.xlu0 %303
  %306 = vset.pattern.permute.xlu0 2
  %307 = vperm.xlu0 %306, %v232
  %v308 = vpop.permute.xlu0 %307
  %310 = vset.pattern.permute.xlu0 2
  %311 = vperm.xlu0 %310, %v233
  %v312 = vpop.permute.xlu0 %311
  %v314 = vadd.f32 %v284, %v274
  %v315 = vadd.f32 %v288, %v275
  %v316 = vadd.f32 %v292, %v276
  %v317 = vadd.f32 %v296, %v277
  %v318 = vadd.f32 %v300, %v278
  %v319 = vadd.f32 %v304, %v279
  %v320 = vadd.f32 %v308, %v280
  %v321 = vadd.f32 %v312, %v281
  %322 = vset.pattern.permute.xlu0 1
  %323 = vperm.xlu0 %322, %v226
  %v324 = vpop.permute.xlu0 %323
  %326 = vset.pattern.permute.xlu0 1
  %327 = vperm.xlu0 %326, %v227
  %v328 = vpop.permute.xlu0 %327
  %330 = vset.pattern.permute.xlu0 1
  %331 = vperm.xlu0 %330, %v228
  %v332 = vpop.permute.xlu0 %331
  %334 = vset.pattern.permute.xlu0 1
  %335 = vperm.xlu0 %334, %v229
  %v336 = vpop.permute.xlu0 %335
  %338 = vset.pattern.permute.xlu0 1
  %339 = vperm.xlu0 %338, %v230
  %v340 = vpop.permute.xlu0 %339
  %342 = vset.pattern.permute.xlu0 1
  %343 = vperm.xlu0 %342, %v231
  %v344 = vpop.permute.xlu0 %343
  %346 = vset.pattern.permute.xlu0 1
  %347 = vperm.xlu0 %346, %v232
  %v348 = vpop.permute.xlu0 %347
  %350 = vset.pattern.permute.xlu0 1
  %351 = vperm.xlu0 %350, %v233
  %v352 = vpop.permute.xlu0 %351
  %v354 = vmul.f32 %v324, %v146
  %v355 = vmul.f32 %v328, %v146
  %v356 = vmul.f32 %v332, %v146
  %v357 = vmul.f32 %v336, %v146
  %v358 = vmul.f32 %v340, %v146
  %v359 = vmul.f32 %v344, %v146
  %v360 = vmul.f32 %v348, %v146
  %v361 = vmul.f32 %v352, %v146
  %v362 = vadd.f32 %v314, %v354
  %v363 = vadd.f32 %v315, %v355
  %v364 = vadd.f32 %v316, %v356
  %v365 = vadd.f32 %v317, %v357
  %v366 = vadd.f32 %v318, %v358
  %v367 = vadd.f32 %v319, %v359
  %v368 = vadd.f32 %v320, %v360
  %v369 = vadd.f32 %v321, %v361
  %v370 = vtanh.pop %v362
  %v371 = vtanh.pop %v363
  %v372 = vtanh.pop %v364
  %v373 = vtanh.pop %v365
  %v374 = vtanh.pop %v366
  %v375 = vtanh.pop %v367
  %v376 = vtanh.pop %v368
  %v377 = vtanh.pop %v369
  %378 = vset.pattern.permute.xlu0 3
  %379 = vperm.xlu0 %378, %v226
  %v380 = vpop.permute.xlu0 %379
  %382 = vset.pattern.permute.xlu0 3
  %383 = vperm.xlu0 %382, %v227
  %v384 = vpop.permute.xlu0 %383
  %386 = vset.pattern.permute.xlu0 3
  %387 = vperm.xlu0 %386, %v228
  %v388 = vpop.permute.xlu0 %387
  %390 = vset.pattern.permute.xlu0 3
  %391 = vperm.xlu0 %390, %v229
  %v392 = vpop.permute.xlu0 %391
  %394 = vset.pattern.permute.xlu0 3
  %395 = vperm.xlu0 %394, %v230
  %v396 = vpop.permute.xlu0 %395
  %398 = vset.pattern.permute.xlu0 3
  %399 = vperm.xlu0 %398, %v231
  %v400 = vpop.permute.xlu0 %399
  %402 = vset.pattern.permute.xlu0 3
  %403 = vperm.xlu0 %402, %v232
  %v404 = vpop.permute.xlu0 %403
  %406 = vset.pattern.permute.xlu0 3
  %407 = vperm.xlu0 %406, %v233
  %v408 = vpop.permute.xlu0 %407
  %v410 = vmul.f32 %v370, %v380
  %v411 = vmul.f32 %v371, %v384
  %v412 = vmul.f32 %v372, %v388
  %v413 = vmul.f32 %v373, %v392
  %v414 = vmul.f32 %v374, %v396
  %v415 = vmul.f32 %v375, %v400
  %v416 = vmul.f32 %v376, %v404
  %v417 = vmul.f32 %v377, %v408
  %v418 = vadd.f32 %v410, %v411
  %v419 = vadd.f32 %v418, %v412
  %v420 = vadd.f32 %v419, %v413
  %v421 = vadd.f32 %v420, %v414
  %v422 = vadd.f32 %v421, %v415
  %v423 = vadd.f32 %v422, %v416
  %v424 = vadd.f32 %v423, %v417
  %v425 = vrot.slane %v424, 4
  %v426 = vadd.f32 %v424, %v425
  %v427 = vrot.slane %v426, 2
  %v428 = vadd.f32 %v426, %v427
  %v429 = vrot.slane %v428, 1
  %v430 = vadd.f32 %v428, %v429
  %v431 = vadd.f32 %v224, %v430
  %s432 = scalar_lea.vmem %s1, 128
  %v433 = vld [vmem:[%s432] sm:$0xff]
  %v434 = vld [vmem:[%s432 + $0x8] sm:$0xff]
  %v435 = vld [vmem:[%s432 + $0x10] sm:$0xff]
  %v436 = vld [vmem:[%s432 + $0x18] sm:$0xff]
  %v437 = vld [vmem:[%s432 + $0x20] sm:$0xff]
  %v438 = vld [vmem:[%s432 + $0x28] sm:$0xff]
  %v439 = vld [vmem:[%s432 + $0x30] sm:$0xff]
  %v440 = vld [vmem:[%s432 + $0x38] sm:$0xff]
  %442 = vset.pattern.permute.xlu0 0
  %443 = vperm.xlu0 %442, %v433
  %v444 = vpop.permute.xlu0 %443
  %447 = vset.pattern.permute.xlu0 0
  %448 = vperm.xlu0 %447, %v434
  %v449 = vpop.permute.xlu0 %448
  %452 = vset.pattern.permute.xlu0 0
  %453 = vperm.xlu0 %452, %v435
  %v454 = vpop.permute.xlu0 %453
  %457 = vset.pattern.permute.xlu0 0
  %458 = vperm.xlu0 %457, %v436
  %v459 = vpop.permute.xlu0 %458
  %462 = vset.pattern.permute.xlu0 0
  %463 = vperm.xlu0 %462, %v437
  %v464 = vpop.permute.xlu0 %463
  %467 = vset.pattern.permute.xlu0 0
  %468 = vperm.xlu0 %467, %v438
  %v469 = vpop.permute.xlu0 %468
  %472 = vset.pattern.permute.xlu0 0
  %473 = vperm.xlu0 %472, %v439
  %v474 = vpop.permute.xlu0 %473
  %477 = vset.pattern.permute.xlu0 0
  %478 = vperm.xlu0 %477, %v440
  %v479 = vpop.permute.xlu0 %478
  %v481 = vmul.f32 %v444, %v65
  %v482 = vmul.f32 %v449, %v65
  %v483 = vmul.f32 %v454, %v65
  %v484 = vmul.f32 %v459, %v65
  %v485 = vmul.f32 %v464, %v65
  %v486 = vmul.f32 %v469, %v65
  %v487 = vmul.f32 %v474, %v65
  %v488 = vmul.f32 %v479, %v65
  %489 = vset.pattern.permute.xlu0 2
  %490 = vperm.xlu0 %489, %v433
  %v491 = vpop.permute.xlu0 %490
  %493 = vset.pattern.permute.xlu0 2
  %494 = vperm.xlu0 %493, %v434
  %v495 = vpop.permute.xlu0 %494
  %497 = vset.pattern.permute.xlu0 2
  %498 = vperm.xlu0 %497, %v435
  %v499 = vpop.permute.xlu0 %498
  %501 = vset.pattern.permute.xlu0 2
  %502 = vperm.xlu0 %501, %v436
  %v503 = vpop.permute.xlu0 %502
  %505 = vset.pattern.permute.xlu0 2
  %506 = vperm.xlu0 %505, %v437
  %v507 = vpop.permute.xlu0 %506
  %509 = vset.pattern.permute.xlu0 2
  %510 = vperm.xlu0 %509, %v438
  %v511 = vpop.permute.xlu0 %510
  %513 = vset.pattern.permute.xlu0 2
  %514 = vperm.xlu0 %513, %v439
  %v515 = vpop.permute.xlu0 %514
  %517 = vset.pattern.permute.xlu0 2
  %518 = vperm.xlu0 %517, %v440
  %v519 = vpop.permute.xlu0 %518
  %v521 = vadd.f32 %v491, %v481
  %v522 = vadd.f32 %v495, %v482
  %v523 = vadd.f32 %v499, %v483
  %v524 = vadd.f32 %v503, %v484
  %v525 = vadd.f32 %v507, %v485
  %v526 = vadd.f32 %v511, %v486
  %v527 = vadd.f32 %v515, %v487
  %v528 = vadd.f32 %v519, %v488
  %529 = vset.pattern.permute.xlu0 1
  %530 = vperm.xlu0 %529, %v433
  %v531 = vpop.permute.xlu0 %530
  %533 = vset.pattern.permute.xlu0 1
  %534 = vperm.xlu0 %533, %v434
  %v535 = vpop.permute.xlu0 %534
  %537 = vset.pattern.permute.xlu0 1
  %538 = vperm.xlu0 %537, %v435
  %v539 = vpop.permute.xlu0 %538
  %541 = vset.pattern.permute.xlu0 1
  %542 = vperm.xlu0 %541, %v436
  %v543 = vpop.permute.xlu0 %542
  %545 = vset.pattern.permute.xlu0 1
  %546 = vperm.xlu0 %545, %v437
  %v547 = vpop.permute.xlu0 %546
  %549 = vset.pattern.permute.xlu0 1
  %550 = vperm.xlu0 %549, %v438
  %v551 = vpop.permute.xlu0 %550
  %553 = vset.pattern.permute.xlu0 1
  %554 = vperm.xlu0 %553, %v439
  %v555 = vpop.permute.xlu0 %554
  %557 = vset.pattern.permute.xlu0 1
  %558 = vperm.xlu0 %557, %v440
  %v559 = vpop.permute.xlu0 %558
  %v561 = vmul.f32 %v531, %v146
  %v562 = vmul.f32 %v535, %v146
  %v563 = vmul.f32 %v539, %v146
  %v564 = vmul.f32 %v543, %v146
  %v565 = vmul.f32 %v547, %v146
  %v566 = vmul.f32 %v551, %v146
  %v567 = vmul.f32 %v555, %v146
  %v568 = vmul.f32 %v559, %v146
  %v569 = vadd.f32 %v521, %v561
  %v570 = vadd.f32 %v522, %v562
  %v571 = vadd.f32 %v523, %v563
  %v572 = vadd.f32 %v524, %v564
  %v573 = vadd.f32 %v525, %v565
  %v574 = vadd.f32 %v526, %v566
  %v575 = vadd.f32 %v527, %v567
  %v576 = vadd.f32 %v528, %v568
  %v577 = vtanh.pop %v569
  %v578 = vtanh.pop %v570
  %v579 = vtanh.pop %v571
  %v580 = vtanh.pop %v572
  %v581 = vtanh.pop %v573
  %v582 = vtanh.pop %v574
  %v583 = vtanh.pop %v575
  %v584 = vtanh.pop %v576
  %585 = vset.pattern.permute.xlu0 3
  %586 = vperm.xlu0 %585, %v433
  %v587 = vpop.permute.xlu0 %586
  %589 = vset.pattern.permute.xlu0 3
  %590 = vperm.xlu0 %589, %v434
  %v591 = vpop.permute.xlu0 %590
  %593 = vset.pattern.permute.xlu0 3
  %594 = vperm.xlu0 %593, %v435
  %v595 = vpop.permute.xlu0 %594
  %597 = vset.pattern.permute.xlu0 3
  %598 = vperm.xlu0 %597, %v436
  %v599 = vpop.permute.xlu0 %598
  %601 = vset.pattern.permute.xlu0 3
  %602 = vperm.xlu0 %601, %v437
  %v603 = vpop.permute.xlu0 %602
  %605 = vset.pattern.permute.xlu0 3
  %606 = vperm.xlu0 %605, %v438
  %v607 = vpop.permute.xlu0 %606
  %609 = vset.pattern.permute.xlu0 3
  %610 = vperm.xlu0 %609, %v439
  %v611 = vpop.permute.xlu0 %610
  %613 = vset.pattern.permute.xlu0 3
  %614 = vperm.xlu0 %613, %v440
  %v615 = vpop.permute.xlu0 %614
  %v617 = vmul.f32 %v577, %v587
  %v618 = vmul.f32 %v578, %v591
  %v619 = vmul.f32 %v579, %v595
  %v620 = vmul.f32 %v580, %v599
  %v621 = vmul.f32 %v581, %v603
  %v622 = vmul.f32 %v582, %v607
  %v623 = vmul.f32 %v583, %v611
  %v624 = vmul.f32 %v584, %v615
  %v625 = vadd.f32 %v617, %v618
  %v626 = vadd.f32 %v625, %v619
  %v627 = vadd.f32 %v626, %v620
  %v628 = vadd.f32 %v627, %v621
  %v629 = vadd.f32 %v628, %v622
  %v630 = vadd.f32 %v629, %v623
  %v631 = vadd.f32 %v630, %v624
  %v632 = vrot.slane %v631, 4
  %v633 = vadd.f32 %v631, %v632
  %v634 = vrot.slane %v633, 2
  %v635 = vadd.f32 %v633, %v634
  %v636 = vrot.slane %v635, 1
  %v637 = vadd.f32 %v635, %v636
  %v638 = vadd.f32 %v431, %v637
  %s639 = scalar_lea.vmem %s1, 192
  %v640 = vld [vmem:[%s639] sm:$0xff]
  %v641 = vld [vmem:[%s639 + $0x8] sm:$0xff]
  %v642 = vld [vmem:[%s639 + $0x10] sm:$0xff]
  %v643 = vld [vmem:[%s639 + $0x18] sm:$0xff]
  %v644 = vld [vmem:[%s639 + $0x20] sm:$0xff]
  %v645 = vld [vmem:[%s639 + $0x28] sm:$0xff]
  %v646 = vld [vmem:[%s639 + $0x30] sm:$0xff]
  %v647 = vld [vmem:[%s639 + $0x38] sm:$0xff]
  %649 = vset.pattern.permute.xlu0 0
  %650 = vperm.xlu0 %649, %v640
  %v651 = vpop.permute.xlu0 %650
  %654 = vset.pattern.permute.xlu0 0
  %655 = vperm.xlu0 %654, %v641
  %v656 = vpop.permute.xlu0 %655
  %659 = vset.pattern.permute.xlu0 0
  %660 = vperm.xlu0 %659, %v642
  %v661 = vpop.permute.xlu0 %660
  %664 = vset.pattern.permute.xlu0 0
  %665 = vperm.xlu0 %664, %v643
  %v666 = vpop.permute.xlu0 %665
  %669 = vset.pattern.permute.xlu0 0
  %670 = vperm.xlu0 %669, %v644
  %v671 = vpop.permute.xlu0 %670
  %674 = vset.pattern.permute.xlu0 0
  %675 = vperm.xlu0 %674, %v645
  %v676 = vpop.permute.xlu0 %675
  %679 = vset.pattern.permute.xlu0 0
  %680 = vperm.xlu0 %679, %v646
  %v681 = vpop.permute.xlu0 %680
  %684 = vset.pattern.permute.xlu0 0
  %685 = vperm.xlu0 %684, %v647
  %v686 = vpop.permute.xlu0 %685
  %v688 = vmul.f32 %v651, %v65
  %v689 = vmul.f32 %v656, %v65
  %v690 = vmul.f32 %v661, %v65
  %v691 = vmul.f32 %v666, %v65
  %v692 = vmul.f32 %v671, %v65
  %v693 = vmul.f32 %v676, %v65
  %v694 = vmul.f32 %v681, %v65
  %v695 = vmul.f32 %v686, %v65
  %696 = vset.pattern.permute.xlu0 2
  %697 = vperm.xlu0 %696, %v640
  %v698 = vpop.permute.xlu0 %697
  %700 = vset.pattern.permute.xlu0 2
  %701 = vperm.xlu0 %700, %v641
  %v702 = vpop.permute.xlu0 %701
  %704 = vset.pattern.permute.xlu0 2
  %705 = vperm.xlu0 %704, %v642
  %v706 = vpop.permute.xlu0 %705
  %708 = vset.pattern.permute.xlu0 2
  %709 = vperm.xlu0 %708, %v643
  %v710 = vpop.permute.xlu0 %709
  %712 = vset.pattern.permute.xlu0 2
  %713 = vperm.xlu0 %712, %v644
  %v714 = vpop.permute.xlu0 %713
  %716 = vset.pattern.permute.xlu0 2
  %717 = vperm.xlu0 %716, %v645
  %v718 = vpop.permute.xlu0 %717
  %720 = vset.pattern.permute.xlu0 2
  %721 = vperm.xlu0 %720, %v646
  %v722 = vpop.permute.xlu0 %721
  %724 = vset.pattern.permute.xlu0 2
  %725 = vperm.xlu0 %724, %v647
  %v726 = vpop.permute.xlu0 %725
  %v728 = vadd.f32 %v698, %v688
  %v729 = vadd.f32 %v702, %v689
  %v730 = vadd.f32 %v706, %v690
  %v731 = vadd.f32 %v710, %v691
  %v732 = vadd.f32 %v714, %v692
  %v733 = vadd.f32 %v718, %v693
  %v734 = vadd.f32 %v722, %v694
  %v735 = vadd.f32 %v726, %v695
  %736 = vset.pattern.permute.xlu0 1
  %737 = vperm.xlu0 %736, %v640
  %v738 = vpop.permute.xlu0 %737
  %740 = vset.pattern.permute.xlu0 1
  %741 = vperm.xlu0 %740, %v641
  %v742 = vpop.permute.xlu0 %741
  %744 = vset.pattern.permute.xlu0 1
  %745 = vperm.xlu0 %744, %v642
  %v746 = vpop.permute.xlu0 %745
  %748 = vset.pattern.permute.xlu0 1
  %749 = vperm.xlu0 %748, %v643
  %v750 = vpop.permute.xlu0 %749
  %752 = vset.pattern.permute.xlu0 1
  %753 = vperm.xlu0 %752, %v644
  %v754 = vpop.permute.xlu0 %753
  %756 = vset.pattern.permute.xlu0 1
  %757 = vperm.xlu0 %756, %v645
  %v758 = vpop.permute.xlu0 %757
  %760 = vset.pattern.permute.xlu0 1
  %761 = vperm.xlu0 %760, %v646
  %v762 = vpop.permute.xlu0 %761
  %764 = vset.pattern.permute.xlu0 1
  %765 = vperm.xlu0 %764, %v647
  %v766 = vpop.permute.xlu0 %765
  %v768 = vmul.f32 %v738, %v146
  %v769 = vmul.f32 %v742, %v146
  %v770 = vmul.f32 %v746, %v146
  %v771 = vmul.f32 %v750, %v146
  %v772 = vmul.f32 %v754, %v146
  %v773 = vmul.f32 %v758, %v146
  %v774 = vmul.f32 %v762, %v146
  %v775 = vmul.f32 %v766, %v146
  %v776 = vadd.f32 %v728, %v768
  %v777 = vadd.f32 %v729, %v769
  %v778 = vadd.f32 %v730, %v770
  %v779 = vadd.f32 %v731, %v771
  %v780 = vadd.f32 %v732, %v772
  %v781 = vadd.f32 %v733, %v773
  %v782 = vadd.f32 %v734, %v774
  %v783 = vadd.f32 %v735, %v775
  %v784 = vtanh.pop %v776
  %v785 = vtanh.pop %v777
  %v786 = vtanh.pop %v778
  %v787 = vtanh.pop %v779
  %v788 = vtanh.pop %v780
  %v789 = vtanh.pop %v781
  %v790 = vtanh.pop %v782
  %v791 = vtanh.pop %v783
  %792 = vset.pattern.permute.xlu0 3
  %793 = vperm.xlu0 %792, %v640
  %v794 = vpop.permute.xlu0 %793
  %796 = vset.pattern.permute.xlu0 3
  %797 = vperm.xlu0 %796, %v641
  %v798 = vpop.permute.xlu0 %797
  %800 = vset.pattern.permute.xlu0 3
  %801 = vperm.xlu0 %800, %v642
  %v802 = vpop.permute.xlu0 %801
  %804 = vset.pattern.permute.xlu0 3
  %805 = vperm.xlu0 %804, %v643
  %v806 = vpop.permute.xlu0 %805
  %808 = vset.pattern.permute.xlu0 3
  %809 = vperm.xlu0 %808, %v644
  %v810 = vpop.permute.xlu0 %809
  %812 = vset.pattern.permute.xlu0 3
  %813 = vperm.xlu0 %812, %v645
  %v814 = vpop.permute.xlu0 %813
  %816 = vset.pattern.permute.xlu0 3
  %817 = vperm.xlu0 %816, %v646
  %v818 = vpop.permute.xlu0 %817
  %820 = vset.pattern.permute.xlu0 3
  %821 = vperm.xlu0 %820, %v647
  %v822 = vpop.permute.xlu0 %821
  %v824 = vmul.f32 %v784, %v794
  %v825 = vmul.f32 %v785, %v798
  %v826 = vmul.f32 %v786, %v802
  %v827 = vmul.f32 %v787, %v806
  %v828 = vmul.f32 %v788, %v810
  %v829 = vmul.f32 %v789, %v814
  %v830 = vmul.f32 %v790, %v818
  %v831 = vmul.f32 %v791, %v822
  %v832 = vadd.f32 %v824, %v825
  %v833 = vadd.f32 %v832, %v826
  %v834 = vadd.f32 %v833, %v827
  %v835 = vadd.f32 %v834, %v828
  %v836 = vadd.f32 %v835, %v829
  %v837 = vadd.f32 %v836, %v830
  %v838 = vadd.f32 %v837, %v831
  %v839 = vrot.slane %v838, 4
  %v840 = vadd.f32 %v838, %v839
  %v841 = vrot.slane %v840, 2
  %v842 = vadd.f32 %v840, %v841
  %v843 = vrot.slane %v842, 1
  %v844 = vadd.f32 %v842, %v843
  %v845 = vadd.f32 %v638, %v844
  %s846 = sld [smem:[#allocation2]]
  %v847 = vstv %s846
  %v848 = vadd.f32 %v845, %v847
  %849 = vst [vmem:[%s3] sm:$0x1] %v848
  // Predicated region
  $region14: #{net_forward.1} parent=0 // pred_check
    _
  $region15: #{net_forward.1} parent=0 // pred_check_branch
    %851 = sbr.rel (0) target = $region17
  $region16: #{net_forward.1} parent=0 // pred_region
    _
  $region17: #{net_forward.1} parent=0 // pred_fallthru
    _
  // Predicated region
  $region18: #{net_forward.1} parent=0 // pred_check
    _
  $region19: #{net_forward.1} parent=0 // pred_check_branch
    %853 = sbr.rel (0) target = $region21
  $region20: #{net_forward.1} parent=0 // pred_region
    _
  $region21: #{net_forward.1} parent=0 // pred_fallthru
    _

</llo_original>
